<compile_context>
chip_gen: v5e
topology: v5e:2x2
jax: 0.10.0
libtpu: 0.0.40
codegen_flags: <defaults>
</compile_context>

<pallas_src>
import functools

import jax
import jax.numpy as jnp
from jax.experimental import pallas as pl
from jax.experimental.pallas import tpu as pltpu

LANE = 128
SUBLANE = 8


def _round_up(n, m):
    return ((n + m - 1) // m) * m


def _pad_to(a, shape):
    if tuple(a.shape) == tuple(shape):
        return a
    pads = [(0, s - d) for d, s in zip(a.shape, shape)]
    return jnp.pad(a, pads)


# --------------------------------------------------------------------------
# Kernel
# --------------------------------------------------------------------------
def actor_kernel(x_ref, w1_ref, b1_ref, w2_ref, b2_ref, w3_ref, b3_ref, o_ref,
                 *, out_dim, compute_dtype):
    cd = compute_dtype
    x = x_ref[...].astype(cd)                      # MXU operand dtype

    # fc1 + relu  (MXU matmul, f32 accumulate; bias/relu in f32 on VPU)
    h1 = jnp.dot(x, w1_ref[...], preferred_element_type=jnp.float32) + b1_ref[...]
    h1 = jnp.maximum(h1, 0.0).astype(cd)

    # fc2 + relu
    h2 = jnp.dot(h1, w2_ref[...], preferred_element_type=jnp.float32) + b2_ref[...]
    h2 = jnp.maximum(h2, 0.0).astype(cd)

    # fc3
    logits = jnp.dot(h2, w3_ref[...], preferred_element_type=jnp.float32) + b3_ref[...]

    # Masked, numerically stable log_softmax over the 128-padded last dim.
    lane = jax.lax.broadcasted_iota(jnp.int32, logits.shape, dimension=1)
    valid = lane < out_dim
    masked_logits = jnp.where(valid, logits, -jnp.inf)
    m = jnp.max(masked_logits, axis=-1, keepdims=True)
    shifted = logits - m
    p = jnp.where(valid, jnp.exp(shifted), 0.0)
    lse = jnp.log(jnp.sum(p, axis=-1, keepdims=True))

    # Lane-dense full-block (unmasked) store.
    o_ref[...] = (shifted - lse).astype(o_ref.dtype)


# --------------------------------------------------------------------------
# Parameter preparation (padding + dtype cast, done ONCE)
# --------------------------------------------------------------------------
def prepare_params(params, compute_dtype=jnp.bfloat16):
    """Pad hidden/out dims to 128 lanes, obs dim only to 8 sublanes.

    Weights are stored in the MXU compute dtype (bf16 by default: MXU-native
    on v5e/v6e/v7x, halves weight bytes); biases stay f32 for the VPU path.
    Returns (padded_params, out_dim).
    """
    w1, b1 = params["w1"], params["b1"]
    w2, b2 = params["w2"], params["b2"]
    w3, b3 = params["w3"], params["b3"]
    obs, hid = w1.shape
    out = w3.shape[1]
    obs_p = _round_up(obs, SUBLANE)     # streamed K dim: no lane padding
    hid_p = _round_up(hid, LANE)
    out_p = _round_up(out, LANE)
    padded = {
        "w1": _pad_to(w1, (obs_p, hid_p)).astype(compute_dtype),
        "b1": _pad_to(b1, (1, hid_p)).astype(jnp.float32),
        "w2": _pad_to(w2, (hid_p, hid_p)).astype(compute_dtype),
        "b2": _pad_to(b2, (1, hid_p)).astype(jnp.float32),
        "w3": _pad_to(w3, (hid_p, out_p)).astype(compute_dtype),
        "b3": _pad_to(b3, (1, out_p)).astype(jnp.float32),
    }
    return padded, out


# --------------------------------------------------------------------------
# Wrapper
# --------------------------------------------------------------------------
def actor_forward(x, padded_params, out_dim, *, block_b=1024,
                  out_dtype=jnp.float32, trim=True):
    """Forward pass of ActorNetwork in a single Pallas kernel.

    x: [B, obs_dim]  (f32, or bf16 to also halve the x HBM stream)
    padded_params: output of prepare_params (compute dtype = w1.dtype)
    returns: [B, out_dim] log-probabilities (or the padded [B_pad, out_pad]
             slab if trim=False, avoiding the extra slice pass).
    """
    w1, b1 = padded_params["w1"], padded_params["b1"]
    w2, b2 = padded_params["w2"], padded_params["b2"]
    w3, b3 = padded_params["w3"], padded_params["b3"]
    compute_dtype = w1.dtype

    B = x.shape[0]
    obs_p, hid_p = w1.shape
    out_p = w3.shape[1]

    # Batch tile: multiple of 8 sublanes, large (amortizes ~0.35us/step
    # pipeline overhead), but capped at ceil(B/2) so large-B grids have at
    # least 2 steps and both v7x TensorCores get work.
    half_b = _round_up(max(-(-B // 2), 1), SUBLANE)
    tb = max(SUBLANE, min(_round_up(block_b, SUBLANE), half_b))
    b_pad = _round_up(B, tb)
    grid = (b_pad // tb,)

    # Only batch rows (and, if obs_dim is not a multiple of 8, a few K cols)
    # are padded — no 128-lane padding of the streamed input.
    x_p = _pad_to(x, (b_pad, obs_p))

    kern = functools.partial(actor_kernel, out_dim=out_dim,
                             compute_dtype=compute_dtype)

    flops = 2 * b_pad * (obs_p * hid_p + hid_p * hid_p + hid_p * out_p)
    bytes_accessed = (
        x_p.size * x_p.dtype.itemsize
        + sum(a.size * a.dtype.itemsize for a in (w1, b1, w2, b2, w3, b3))
        + b_pad * out_p * jnp.dtype(out_dtype).itemsize)
    cost = pl.CostEstimate(flops=flops,
                           transcendentals=b_pad * out_dim,
                           bytes_accessed=bytes_accessed)

    out_padded = pl.pallas_call(
        kern,
        out_shape=jax.ShapeDtypeStruct((b_pad, out_p), out_dtype),
        grid=grid,
        in_specs=[
            pl.BlockSpec((tb, obs_p), lambda i: (i, 0)),      # x tile (streamed)
            pl.BlockSpec((obs_p, hid_p), lambda i: (0, 0)),   # w1 (VMEM-resident)
            pl.BlockSpec((1, hid_p), lambda i: (0, 0)),       # b1
            pl.BlockSpec((hid_p, hid_p), lambda i: (0, 0)),   # w2
            pl.BlockSpec((1, hid_p), lambda i: (0, 0)),       # b2
            pl.BlockSpec((hid_p, out_p), lambda i: (0, 0)),   # w3
            pl.BlockSpec((1, out_p), lambda i: (0, 0)),       # b3
        ],
        out_specs=pl.BlockSpec((tb, out_p), lambda i: (i, 0)),
        compiler_params=pltpu.CompilerParams(
            dimension_semantics=("parallel",),
            vmem_limit_bytes=32 * 1024 * 1024),
        cost_estimate=cost,
    )(x_p, w1, b1, w2, b2, w3, b3)

    if trim:
        return out_padded[:B, :out_dim]
    return out_padded


# --------------------------------------------------------------------------
# Init + pure-JAX reference
# --------------------------------------------------------------------------
def init_params(key, obs_dim, hidden, out_dim):
    """Deterministic init mimicking nn.Linear's uniform(-1/sqrt(fan_in), ...)."""
    ks = jax.random.split(key, 6)

    def linear(kw, kb, fan_in, fan_out):
        bound = 1.0 / jnp.sqrt(fan_in)
        w = jax.random.uniform(kw, (fan_in, fan_out), jnp.float32, -bound, bound)
        b = jax.random.uniform(kb, (1, fan_out), jnp.float32, -bound, bound)
        return w, b

    w1, b1 = linear(ks[0], ks[1], obs_dim, hidden)
    w2, b2 = linear(ks[2], ks[3], hidden, hidden)
    w3, b3 = linear(ks[4], ks[5], hidden, out_dim)
    return {"w1": w1, "b1": b1, "w2": w2, "b2": b2, "w3": w3, "b3": b3}


def reference_forward(x, params):
    h1 = jnp.maximum(x @ params["w1"] + params["b1"], 0.0)
    h2 = jnp.maximum(h1 @ params["w2"] + params["b2"], 0.0)
    logits = h2 @ params["w3"] + params["b3"]
    return jax.nn.log_softmax(logits, axis=-1)


if __name__ == "__main__":
    key = jax.random.PRNGKey(0)
    k_x, k_p, k_x2 = jax.random.split(key, 3)

    B, obs_dim, hidden, out_dim = 8, 16, 32, 10
    x = jax.random.normal(k_x, (B, obs_dim), jnp.float32)
    params = init_params(k_p, obs_dim, hidden, out_dim)
    ref = reference_forward(x, params)

    # f32 compute path (tight check)
    pparams_f32, out_d = prepare_params(params, compute_dtype=jnp.float32)
    out_f32 = jax.block_until_ready(actor_forward(x, pparams_f32, out_d))
    assert out_f32.shape == (B, out_dim)
    assert jnp.allclose(out_f32, ref, atol=2e-5, rtol=2e-5), "f32 mismatch vs reference"

    # Default bf16 compute path (MXU-native on v5e/v6e/v7x) — loose check
    pparams_bf16, _ = prepare_params(params)            # bf16 default
    out_bf16 = jax.block_until_ready(actor_forward(x, pparams_bf16, out_d))
    assert out_bf16.shape == (B, out_dim)
    assert jnp.allclose(out_bf16, ref, atol=1e-1, rtol=1e-1), "bf16 mismatch vs reference"

    # Larger, non-aligned batch exercises the multi-step (>=2) grid path and
    # batch padding; f32 weights for a tight check of the tiling logic.
    B2 = 300
    x2 = jax.random.normal(k_x2, (B2, obs_dim), jnp.float32)
    ref2 = reference_forward(x2, params)
    out2 = jax.block_until_ready(actor_forward(x2, pparams_f32, out_d))
    assert out2.shape == (B2, out_dim)
    assert jnp.allclose(out2, ref2, atol=2e-5, rtol=2e-5), "multi-tile f32 mismatch"

    print("KERNEL_OK")
</pallas_src>

<mosaic_0001>
module attributes {stable_mosaic.version = 11 : i64} {
  func.func @actor_kernel(%arg0: i32, %arg1: memref<8x16xf32, #tpu.memory_space<vmem>>, %arg2: memref<16x128xf32, #tpu.memory_space<vmem>>, %arg3: memref<1x128xf32, #tpu.memory_space<vmem>>, %arg4: memref<128x128xf32, #tpu.memory_space<vmem>>, %arg5: memref<1x128xf32, #tpu.memory_space<vmem>>, %arg6: memref<128x128xf32, #tpu.memory_space<vmem>>, %arg7: memref<1x128xf32, #tpu.memory_space<vmem>>, %arg8: memref<8x128xf32, #tpu.memory_space<vmem>>) attributes {dimension_semantics = [#tpu.dimension_semantics<parallel>], iteration_bounds = array<i64: 1>, scalar_prefetch = 0 : i64, scratch_operands = 0 : i64, tpu.core_type = #tpu.core_type<tc>, window_params = [{transform_indices = @transform_0, window_bounds = array<i64: 8, 16>}, {pipeline_mode = #tpu.pipeline_mode<synchronous>, transform_indices = @transform_1, window_bounds = array<i64: 16, 128>}, {pipeline_mode = #tpu.pipeline_mode<synchronous>, transform_indices = @transform_2, window_bounds = array<i64: 1, 128>}, {pipeline_mode = #tpu.pipeline_mode<synchronous>, transform_indices = @transform_3, window_bounds = array<i64: 128, 128>}, {pipeline_mode = #tpu.pipeline_mode<synchronous>, transform_indices = @transform_4, window_bounds = array<i64: 1, 128>}, {pipeline_mode = #tpu.pipeline_mode<synchronous>, transform_indices = @transform_5, window_bounds = array<i64: 128, 128>}, {pipeline_mode = #tpu.pipeline_mode<synchronous>, transform_indices = @transform_6, window_bounds = array<i64: 1, 128>}, {transform_indices = @transform_7, window_bounds = array<i64: 8, 128>}]} {
    %c0 = arith.constant 0 : index
    %c0_0 = arith.constant 0 : index
    %0 = vector.load %arg1[%c0, %c0_0] : memref<8x16xf32, #tpu.memory_space<vmem>>, vector<8x16xf32>
    %c0_1 = arith.constant 0 : index
    %c0_2 = arith.constant 0 : index
    %1 = vector.load %arg2[%c0_1, %c0_2] : memref<16x128xf32, #tpu.memory_space<vmem>>, vector<16x128xf32>
    %cst = arith.constant dense<0.000000e+00> : vector<8x128xf32>
    %2 = tpu.matmul %0, %1, %cst {dimension_numbers = #tpu.dot_dimension_numbers<[1], [0], [0], [1], [0, 0, 1, 1], [], []>} : vector<8x16xf32>, vector<16x128xf32>, vector<8x128xf32> -> vector<8x128xf32>
    %c0_3 = arith.constant 0 : index
    %c0_4 = arith.constant 0 : index
    %3 = vector.load %arg3[%c0_3, %c0_4] : memref<1x128xf32, #tpu.memory_space<vmem>>, vector<1x128xf32>
    %4 = vector.broadcast %3 : vector<1x128xf32> to vector<8x128xf32>
    %5 = arith.addf %2, %4 : vector<8x128xf32>
    %cst_5 = arith.constant 0.000000e+00 : f32
    %6 = vector.broadcast %cst_5 : f32 to vector<8x128xf32>
    %7 = arith.maximumf %5, %6 : vector<8x128xf32>
    %c0_6 = arith.constant 0 : index
    %c0_7 = arith.constant 0 : index
    %8 = vector.load %arg4[%c0_6, %c0_7] : memref<128x128xf32, #tpu.memory_space<vmem>>, vector<128x128xf32>
    %cst_8 = arith.constant dense<0.000000e+00> : vector<8x128xf32>
    %9 = tpu.matmul %7, %8, %cst_8 {dimension_numbers = #tpu.dot_dimension_numbers<[1], [0], [0], [1], [0, 0, 1, 1], [], []>} : vector<8x128xf32>, vector<128x128xf32>, vector<8x128xf32> -> vector<8x128xf32>
    %c0_9 = arith.constant 0 : index
    %c0_10 = arith.constant 0 : index
    %10 = vector.load %arg5[%c0_9, %c0_10] : memref<1x128xf32, #tpu.memory_space<vmem>>, vector<1x128xf32>
    %11 = vector.broadcast %10 : vector<1x128xf32> to vector<8x128xf32>
    %12 = arith.addf %9, %11 : vector<8x128xf32>
    %cst_11 = arith.constant 0.000000e+00 : f32
    %13 = vector.broadcast %cst_11 : f32 to vector<8x128xf32>
    %14 = arith.maximumf %12, %13 : vector<8x128xf32>
    %c0_12 = arith.constant 0 : index
    %c0_13 = arith.constant 0 : index
    %15 = vector.load %arg6[%c0_12, %c0_13] : memref<128x128xf32, #tpu.memory_space<vmem>>, vector<128x128xf32>
    %cst_14 = arith.constant dense<0.000000e+00> : vector<8x128xf32>
    %16 = tpu.matmul %14, %15, %cst_14 {dimension_numbers = #tpu.dot_dimension_numbers<[1], [0], [0], [1], [0, 0, 1, 1], [], []>} : vector<8x128xf32>, vector<128x128xf32>, vector<8x128xf32> -> vector<8x128xf32>
    %c0_15 = arith.constant 0 : index
    %c0_16 = arith.constant 0 : index
    %17 = vector.load %arg7[%c0_15, %c0_16] : memref<1x128xf32, #tpu.memory_space<vmem>>, vector<1x128xf32>
    %18 = vector.broadcast %17 : vector<1x128xf32> to vector<8x128xf32>
    %19 = arith.addf %16, %18 : vector<8x128xf32>
    %20 = tpu.iota {dimensions = array<i32: 1>} : vector<8x128xi32>
    %c10_i32 = arith.constant 10 : i32
    %21 = vector.broadcast %c10_i32 : i32 to vector<8x128xi32>
    %22 = arith.cmpi slt, %20, %21 : vector<8x128xi32>
    %cst_17 = arith.constant 0xFF800000 : f32
    %23 = vector.broadcast %cst_17 : f32 to vector<8x128xf32>
    %24 = arith.select %22, %19, %23 : vector<8x128xi1>, vector<8x128xf32>
    %cst_18 = arith.constant dense<0xFF800000> : vector<8xf32>
    %25 = vector.multi_reduction <maximumf>, %24, %cst_18 [1] : vector<8x128xf32> to vector<8xf32>
    %26 = vector.shape_cast %25 : vector<8xf32> to vector<8x1xf32>
    %27 = vector.broadcast %26 : vector<8x1xf32> to vector<8x128xf32>
    %28 = arith.subf %19, %27 : vector<8x128xf32>
    %29 = math.exp %28 : vector<8x128xf32>
    %cst_19 = arith.constant 0.000000e+00 : f32
    %30 = vector.broadcast %cst_19 : f32 to vector<8x128xf32>
    %31 = arith.select %22, %29, %30 : vector<8x128xi1>, vector<8x128xf32>
    %cst_20 = arith.constant dense<0.000000e+00> : vector<8xf32>
    %32 = vector.multi_reduction <add>, %31, %cst_20 [1] : vector<8x128xf32> to vector<8xf32>
    %33 = vector.shape_cast %32 : vector<8xf32> to vector<8x1xf32>
    %34 = math.log %33 : vector<8x1xf32>
    %35 = vector.broadcast %34 : vector<8x1xf32> to vector<8x128xf32>
    %36 = arith.subf %28, %35 : vector<8x128xf32>
    %c0_21 = arith.constant 0 : index
    %c0_22 = arith.constant 0 : index
    %37 = vector.load %arg8[%c0_21, %c0_22] : memref<8x128xf32, #tpu.memory_space<vmem>>, vector<8x128xf32>
    tpu.vector_store %arg8[%c0_21, %c0_22], %36 {strides = array<i32>} : memref<8x128xf32, #tpu.memory_space<vmem>>, vector<8x128xf32>,
    return
  }
  func.func @transform_0(%arg0: i32) -> (i32, i32) {
    %c0_i32 = arith.constant 0 : i32
    %c0_i32_0 = arith.constant 0 : i32
    return %arg0, %c0_i32 : i32, i32
  }
  func.func @transform_1(%arg0: i32) -> (i32, i32) {
    %c0_i32 = arith.constant 0 : i32
    %c0_i32_0 = arith.constant 0 : i32
    %c0_i32_1 = arith.constant 0 : i32
    return %c0_i32, %c0_i32_0 : i32, i32
  }
  func.func @transform_2(%arg0: i32) -> (i32, i32) {
    %c0_i32 = arith.constant 0 : i32
    %c0_i32_0 = arith.constant 0 : i32
    %c0_i32_1 = arith.constant 0 : i32
    return %c0_i32, %c0_i32_0 : i32, i32
  }
  func.func @transform_3(%arg0: i32) -> (i32, i32) {
    %c0_i32 = arith.constant 0 : i32
    %c0_i32_0 = arith.constant 0 : i32
    %c0_i32_1 = arith.constant 0 : i32
    return %c0_i32, %c0_i32_0 : i32, i32
  }
  func.func @transform_4(%arg0: i32) -> (i32, i32) {
    %c0_i32 = arith.constant 0 : i32
    %c0_i32_0 = arith.constant 0 : i32
    %c0_i32_1 = arith.constant 0 : i32
    return %c0_i32, %c0_i32_0 : i32, i32
  }
  func.func @transform_5(%arg0: i32) -> (i32, i32) {
    %c0_i32 = arith.constant 0 : i32
    %c0_i32_0 = arith.constant 0 : i32
    %c0_i32_1 = arith.constant 0 : i32
    return %c0_i32, %c0_i32_0 : i32, i32
  }
  func.func @transform_6(%arg0: i32) -> (i32, i32) {
    %c0_i32 = arith.constant 0 : i32
    %c0_i32_0 = arith.constant 0 : i32
    %c0_i32_1 = arith.constant 0 : i32
    return %c0_i32, %c0_i32_0 : i32, i32
  }
  func.func @transform_7(%arg0: i32) -> (i32, i32) {
    %c0_i32 = arith.constant 0 : i32
    %c0_i32_0 = arith.constant 0 : i32
    return %arg0, %c0_i32 : i32, i32
  }
}

</mosaic_0001>

<llo_original>
// kernel: tpu_custom_call.1
$region0: #{tpu_custom_call.1}
  #allocation0 [shape = 'u32[]', space=smem, size = 0x4, offset = 0x4, fixed_abs, tag = 'smem constant byte address 0x4 - core index']
  #allocation1 [shape = 'u32[72,128]{1,0:T(1,128)}', space=vmem, size = 0x9000, scoped, tag = 'internal scratch']
  %s0 = inlined_call_operand.hbm [shape: f32[8,16], index: 0, kind: input, shape index: {}]
  %s1 = inlined_call_operand.hbm [shape: f32[16,128], index: 1, kind: input, shape index: {}]
  %s2 = inlined_call_operand.vmem [shape: f32[1,128], index: 2, kind: input, shape index: {}]
  %s3 = inlined_call_operand.hbm [shape: f32[128,128], index: 3, kind: input, shape index: {}]
  %s4 = inlined_call_operand.vmem [shape: f32[1,128], index: 4, kind: input, shape index: {}]
  %s5 = inlined_call_operand.hbm [shape: f32[128,128], index: 5, kind: input, shape index: {}]
  %s6 = inlined_call_operand.vmem [shape: f32[1,128], index: 6, kind: input, shape index: {}]
  %s7 = inlined_call_operand.hbm [shape: f32[8,128], index: 7, kind: output, shape index: {}]
  %s8 = sld [smem:[#allocation0]]
  $region54: #{tpu_custom_call.1} parent=0
    _
  %s10 = ssub.s32 1, %s8
  %s11 = scalar_select 0, %s10, %s8
  $region1: #{tpu_custom_call.1} parent=0
    #allocation2 [shape = 'u8[4096]{0}', space=vmem, size = 0x1000, scoped, tag = 'input window, operand 0, single buffered']
    #allocation3 [shape = 's32[1]{0}', space=sflag, size = 0x4, scoped, tag = 'scoped memory for tpu_custom_call.1']
    #allocation4 [shape = 's32[1]{0}', space=sflag, size = 0x4, scoped, tag = 'scoped memory for tpu_custom_call.1']
    #allocation5 [shape = 'u8[8192]{0}', space=vmem, size = 0x2000, scoped, tag = 'input window, operand 1, single buffered']
    #allocation6 [shape = 's32[1]{0}', space=sflag, size = 0x4, scoped, tag = 'scoped memory for tpu_custom_call.1']
    #allocation7 [shape = 'u8[65536]{0}', space=vmem, size = 0x10000, scoped, tag = 'input window, operand 3, single buffered']
    #allocation8 [shape = 'u8[65536]{0}', space=vmem, size = 0x10000, scoped, tag = 'input window, operand 5, single buffered']
    #allocation9 [shape = 's32[1]{0}', space=sflag, size = 0x4, scoped, tag = 'scoped memory for tpu_custom_call.1']
    #allocation10 [shape = 'u8[4096]{0}', space=vmem, size = 0x1000, scoped, tag = 'output window, operand 0, single buffered']
    %12 = vsyncpa [#allocation3], 0
    %13 = vsyncpa [#allocation6], 0
    %14 = vsyncpa [#allocation9], 0
    %15 = vsyncpa [#allocation4], 0
    // Predicated region
    $region2: #{tpu_custom_call.1} parent=1 // pred_check
      _
    $region3: #{tpu_custom_call.1} parent=1 // pred_check_branch
      %17 = sbr.rel (0) target = $region5
    $region4: #{tpu_custom_call.1} parent=1 // pred_region
      %19 = vsyncadd [#allocation3], 0
      %s21 = sshll.u32 %s0, 4
      %s22 = int_to_ptr.hbm [resolvable:$true] %s21
      %s23 = sshll.u32 [#allocation2], 4
      %s24 = int_to_ptr.vmem [resolvable:$true] %s23
      %26 = dma.hbm_to_vmem [thread:$0]  %s22, 128, %s24, [#allocation3]
    $region5: #{tpu_custom_call.1} parent=1 // pred_fallthru
      _
    // Predicated region
    $region6: #{tpu_custom_call.1} parent=1 // pred_check
      _
    $region7: #{tpu_custom_call.1} parent=1 // pred_check_branch
      %28 = sbr.rel (0) target = $region9
    $region8: #{tpu_custom_call.1} parent=1 // pred_region
      %30 = vsyncadd [#allocation6], 0
      %s31 = sshll.u32 %s1, 4
      %s32 = int_to_ptr.hbm [resolvable:$true] %s31
      %s33 = sshll.u32 [#allocation5], 4
      %s34 = int_to_ptr.vmem [resolvable:$true] %s33
      %39 = dma.hbm_to_vmem [thread:$0]  %s32, 256, %s34, [#allocation6], 128, 128, 8
    $region9: #{tpu_custom_call.1} parent=1 // pred_fallthru
      _
    // Predicated region
    $region10: #{tpu_custom_call.1} parent=1 // pred_check
      _
    $region11: #{tpu_custom_call.1} parent=1 // pred_check_branch
      %41 = sbr.rel (0) target = $region13
    $region12: #{tpu_custom_call.1} parent=1 // pred_region
      _
    $region13: #{tpu_custom_call.1} parent=1 // pred_fallthru
      _
    // Predicated region
    $region14: #{tpu_custom_call.1} parent=1 // pred_check
      _
    $region15: #{tpu_custom_call.1} parent=1 // pred_check_branch
      %43 = sbr.rel (0) target = $region17
    $region16: #{tpu_custom_call.1} parent=1 // pred_region
      %45 = vsyncadd [#allocation6], 0
      %s46 = sshll.u32 %s3, 4
      %s47 = int_to_ptr.hbm [resolvable:$true] %s46
      %s48 = sshll.u32 [#allocation7], 4
      %s49 = int_to_ptr.vmem [resolvable:$true] %s48
      %54 = dma.hbm_to_vmem [thread:$0]  %s47, 2048, %s49, [#allocation6], 128, 128, 8
    $region17: #{tpu_custom_call.1} parent=1 // pred_fallthru
      _
    // Predicated region
    $region18: #{tpu_custom_call.1} parent=1 // pred_check
      _
    $region19: #{tpu_custom_call.1} parent=1 // pred_check_branch
      %56 = sbr.rel (0) target = $region21
    $region20: #{tpu_custom_call.1} parent=1 // pred_region
      _
    $region21: #{tpu_custom_call.1} parent=1 // pred_fallthru
      _
    // Predicated region
    $region22: #{tpu_custom_call.1} parent=1 // pred_check
      _
    $region23: #{tpu_custom_call.1} parent=1 // pred_check_branch
      %58 = sbr.rel (0) target = $region25
    $region24: #{tpu_custom_call.1} parent=1 // pred_region
      %60 = vsyncadd [#allocation9], 0
      %s61 = sshll.u32 %s5, 4
      %s62 = int_to_ptr.hbm [resolvable:$true] %s61
      %s63 = sshll.u32 [#allocation8], 4
      %s64 = int_to_ptr.vmem [resolvable:$true] %s63
      %69 = dma.hbm_to_vmem [thread:$0]  %s62, 2048, %s64, [#allocation9], 128, 128, 8
    $region25: #{tpu_custom_call.1} parent=1 // pred_fallthru
      _
    // Predicated region
    $region26: #{tpu_custom_call.1} parent=1 // pred_check
      _
    $region27: #{tpu_custom_call.1} parent=1 // pred_check_branch
      %71 = sbr.rel (0) target = $region29
    $region28: #{tpu_custom_call.1} parent=1 // pred_region
      _
    $region29: #{tpu_custom_call.1} parent=1 // pred_fallthru
      _
    // Predicated region
    $region30: #{tpu_custom_call.1} parent=1 // pred_check
      _
    $region31: #{tpu_custom_call.1} parent=1 // pred_check_branch
      %73 = sbr.rel (0) target = $region33
    $region32: #{tpu_custom_call.1} parent=1 // pred_region
      %75 = dma.done [#allocation3], 128
    $region33: #{tpu_custom_call.1} parent=1 // pred_fallthru
      _
    // Predicated region
    $region34: #{tpu_custom_call.1} parent=1 // pred_check
      _
    $region35: #{tpu_custom_call.1} parent=1 // pred_check_branch
      %77 = sbr.rel (0) target = $region37
    $region36: #{tpu_custom_call.1} parent=1 // pred_region
      %79 = dma.done [#allocation6], 256
    $region37: #{tpu_custom_call.1} parent=1 // pred_fallthru
      _
    // Predicated region
    $region38: #{tpu_custom_call.1} parent=1 // pred_check
      _
    $region39: #{tpu_custom_call.1} parent=1 // pred_check_branch
      %81 = sbr.rel (0) target = $region41
    $region40: #{tpu_custom_call.1} parent=1 // pred_region
      %83 = dma.done [#allocation6], 2048
    $region41: #{tpu_custom_call.1} parent=1 // pred_fallthru
      _
    // Predicated region
    $region42: #{tpu_custom_call.1} parent=1 // pred_check
      _
    $region43: #{tpu_custom_call.1} parent=1 // pred_check_branch
      %85 = sbr.rel (0) target = $region45
    $region44: #{tpu_custom_call.1} parent=1 // pred_region
      %87 = dma.done [#allocation9], 2048
    $region45: #{tpu_custom_call.1} parent=1 // pred_fallthru
      _
    %v88 = vld [vmem:[#allocation2] sm:$0xff]
    %v89 = vld [vmem:[#allocation5] sm:$0xff]
    %v90 = vld [vmem:[#allocation5 + $0x8] sm:$0xff]
    %v91 = vld [vmem:[%s2] sm:$0x1]
    %v93 = vperm.slane %v91, 0
    %vm95 = vcmask 130048
    %v97 = vsel %vm95, %v88, 0
    %99 = vmatpush.msra.mxu0 0.0
    %100 = vmatpush.msra.mxu0 0.0
    %101 = vmatpush.msra.mxu0 0.0
    %102 = vmatpush.msra.mxu0 0.0
    %103 = vmatpush.msra.mxu0 0.0
    %104 = vmatpush.msra.mxu0 0.0
    %105 = vmatpush.msra.mxu0 0.0
    %106 = vmatpush.msra.mxu0 0.0
    %107 = vmatpush.msra.mxu0 0.0
    %108 = vmatpush.msra.mxu0 0.0
    %109 = vmatpush.msra.mxu0 0.0
    %110 = vmatpush.msra.mxu0 0.0
    %111 = vmatpush.msra.mxu0 0.0
    %112 = vmatpush.msra.mxu0 0.0
    %113 = vmatpush.msra.mxu0 %v90
    %114 = vmatpush.msra.mxu0 %v89
    %115 = vmatmul.f32.gmra.mxu0 %v97
    %v116 = vpop.f32.mrf.mxu0
    %v117 = vadd.f32 %v93, %v116
    %118 = vdwg.mxu0
    %v119 = vmax.f32 %v117, 0.0
    %v120 = vld [vmem:[#allocation7] sm:$0xff]
    %v121 = vld [vmem:[#allocation7 + $0x8] sm:$0xff]
    %v122 = vld [vmem:[#allocation7 + $0x10] sm:$0xff]
    %v123 = vld [vmem:[#allocation7 + $0x18] sm:$0xff]
    %v124 = vld [vmem:[#allocation7 + $0x20] sm:$0xff]
    %v125 = vld [vmem:[#allocation7 + $0x28] sm:$0xff]
    %v126 = vld [vmem:[#allocation7 + $0x30] sm:$0xff]
    %v127 = vld [vmem:[#allocation7 + $0x38] sm:$0xff]
    %v128 = vld [vmem:[#allocation7 + $0x40] sm:$0xff]
    %v129 = vld [vmem:[#allocation7 + $0x48] sm:$0xff]
    %v130 = vld [vmem:[#allocation7 + $0x50] sm:$0xff]
    %v131 = vld [vmem:[#allocation7 + $0x58] sm:$0xff]
    %v132 = vld [vmem:[#allocation7 + $0x60] sm:$0xff]
    %v133 = vld [vmem:[#allocation7 + $0x68] sm:$0xff]
    %v134 = vld [vmem:[#allocation7 + $0x70] sm:$0xff]
    %v135 = vld [vmem:[#allocation7 + $0x78] sm:$0xff]
    %v136 = vld [vmem:[%s4] sm:$0x1]
    %v138 = vperm.slane %v136, 0
    %140 = vmatpush.msra.mxu0 %v135
    %141 = vmatpush.msra.mxu0 %v134
    %142 = vmatpush.msra.mxu0 %v133
    %143 = vmatpush.msra.mxu0 %v132
    %144 = vmatpush.msra.mxu0 %v131
    %145 = vmatpush.msra.mxu0 %v130
    %146 = vmatpush.msra.mxu0 %v129
    %147 = vmatpush.msra.mxu0 %v128
    %148 = vmatpush.msra.mxu0 %v127
    %149 = vmatpush.msra.mxu0 %v126
    %150 = vmatpush.msra.mxu0 %v125
    %151 = vmatpush.msra.mxu0 %v124
    %152 = vmatpush.msra.mxu0 %v123
    %153 = vmatpush.msra.mxu0 %v122
    %154 = vmatpush.msra.mxu0 %v121
    %155 = vmatpush.msra.mxu0 %v120
    %156 = vmatmul.f32.gmra.mxu0 %v119
    %v157 = vpop.f32.mrf.mxu0
    %v158 = vadd.f32 %v138, %v157
    %159 = vdwg.mxu0
    %v160 = vmax.f32 %v158, 0.0
    %v161 = vld [vmem:[#allocation8] sm:$0xff]
    %v162 = vld [vmem:[#allocation8 + $0x8] sm:$0xff]
    %v163 = vld [vmem:[#allocation8 + $0x10] sm:$0xff]
    %v164 = vld [vmem:[#allocation8 + $0x18] sm:$0xff]
    %v165 = vld [vmem:[#allocation8 + $0x20] sm:$0xff]
    %v166 = vld [vmem:[#allocation8 + $0x28] sm:$0xff]
    %v167 = vld [vmem:[#allocation8 + $0x30] sm:$0xff]
    %v168 = vld [vmem:[#allocation8 + $0x38] sm:$0xff]
    %v169 = vld [vmem:[#allocation8 + $0x40] sm:$0xff]
    %v170 = vld [vmem:[#allocation8 + $0x48] sm:$0xff]
    %v171 = vld [vmem:[#allocation8 + $0x50] sm:$0xff]
    %v172 = vld [vmem:[#allocation8 + $0x58] sm:$0xff]
    %v173 = vld [vmem:[#allocation8 + $0x60] sm:$0xff]
    %v174 = vld [vmem:[#allocation8 + $0x68] sm:$0xff]
    %v175 = vld [vmem:[#allocation8 + $0x70] sm:$0xff]
    %v176 = vld [vmem:[#allocation8 + $0x78] sm:$0xff]
    %v177 = vld [vmem:[%s6] sm:$0x1]
    %v179 = vperm.slane %v177, 0
    %181 = vmatpush.msra.mxu0 %v176
    %182 = vmatpush.msra.mxu0 %v175
    %183 = vmatpush.msra.mxu0 %v174
    %184 = vmatpush.msra.mxu0 %v173
    %185 = vmatpush.msra.mxu0 %v172
    %186 = vmatpush.msra.mxu0 %v171
    %187 = vmatpush.msra.mxu0 %v170
    %188 = vmatpush.msra.mxu0 %v169
    %189 = vmatpush.msra.mxu0 %v168
    %190 = vmatpush.msra.mxu0 %v167
    %191 = vmatpush.msra.mxu0 %v166
    %192 = vmatpush.msra.mxu0 %v165
    %193 = vmatpush.msra.mxu0 %v164
    %194 = vmatpush.msra.mxu0 %v163
    %195 = vmatpush.msra.mxu0 %v162
    %196 = vmatpush.msra.mxu0 %v161
    %197 = vmatmul.f32.gmra.mxu0 %v160
    %v198 = vpop.f32.mrf.mxu0
    %v199 = vadd.f32 %v179, %v198
    %200 = vdwg.mxu0
    %v201 = vlaneseq
    %v202 = vand.u32 %v201, 127
    %vm203 = vcmp.lt.s32.totalorder %v202, 10
    %v204 = vsel %vm203, %v199, -inf
    %205 = vmax.xlane.f32.xlu0 %v204
    %v206 = vpop.xlane.xlu0 %205
    %v207 = vsub.f32 %v199, %v206
    %v208 = vmul.f32 %v207, 1.442695
    %v209 = vpow.pop %v208
    %v210 = vsel %vm203, %v209, 0.0
    %211 = vadd.xlane.f32.xlu0 %v210
    %v212 = vpop.xlane.xlu0 %211
    %v213 = vlog2.pop %v212
    %v214 = vmul.f32 %v213, 0.6931472
    %v215 = vsub.f32 %v207, %v214
    %216 = vst [vmem:[#allocation10] sm:$0xff] %v215
    // Predicated region
    $region46: #{tpu_custom_call.1} parent=1 // pred_check
      _
    $region47: #{tpu_custom_call.1} parent=1 // pred_check_branch
      %218 = sbr.rel (0) target = $region49
    $region48: #{tpu_custom_call.1} parent=1 // pred_region
      %220 = vsyncadd [#allocation4], 0
      %s222 = sshll.u32 [#allocation10], 4
      %s223 = int_to_ptr.vmem [resolvable:$true] %s222
      %s224 = sshll.u32 %s7, 4
      %s225 = int_to_ptr.hbm [resolvable:$true] %s224
      %227 = dma.vmem_to_hbm [thread:$0]  %s223, 128, %s225, [#allocation4]
    $region49: #{tpu_custom_call.1} parent=1 // pred_fallthru
      _
    // Predicated region
    $region50: #{tpu_custom_call.1} parent=1 // pred_check
      _
    $region51: #{tpu_custom_call.1} parent=1 // pred_check_branch
      %229 = sbr.rel (0) target = $region53
    $region52: #{tpu_custom_call.1} parent=1 // pred_region
      %231 = dma.done [#allocation4], 128
    $region53: #{tpu_custom_call.1} parent=1 // pred_fallthru
      _
    %232 = vsyncpa [#allocation3], 1
    %233 = vsyncpa [#allocation6], 1
    %234 = vsyncpa [#allocation9], 1
    %235 = vsyncpa [#allocation4], 1

</llo_original>
